<compile_context>
chip_gen: v6e
topology: v6e:2x2x1
jax: 0.10.0
libtpu: 0.0.40
codegen_flags: <defaults>
</compile_context>

<pallas_src>
import functools
import math

import jax
import jax.numpy as jnp
from jax import lax
from jax.experimental import pallas as pl
from jax.experimental.pallas import tpu as pltpu


def _mhp_kernel(qt_ref, x_ref, wvo_ref, bo_ref, o_ref, ctx_ref,
                *, block_b: int, seq_len: int, num_queries: int):
    """One grid step processes `block_b` batch elements.

    qt_ref : (P, E)           folded queries  ((q Wq^T + bq)/sqrt(E)) Wk   (compute dtype)
    x_ref  : (block_b*S, E)   input rows of this batch block               (compute dtype)
    wvo_ref: (E, E)           fused V -> output projection  Wv^T Wo^T      (compute dtype)
    bo_ref : (1, E)           fused output bias  bv Wo^T + bo              (f32)
    o_ref  : (block_b*P, E)   pooled outputs (batch-major, query-minor rows)
    ctx_ref: (block_b*P, E)   VMEM scratch: attention-weighted x rows      (compute dtype)
    """
    x2d = x_ref[...]                                                # (Bb*S, E)
    cd = x2d.dtype

    # One large-M score matmul for the whole batch block (contraction over E,
    # f32 accumulation on the MXU): (Bb*S, E) x (P, E)^T -> (Bb*S, P).
    s_all = lax.dot_general(x2d, qt_ref[...], (((1,), (1,)), ((), ())),
                            preferred_element_type=jnp.float32)

    # Per-batch-element softmax over S + attention-weighted sum of x rows.
    # These are tiny (S*P scores, P*S*E MACs); the heavy matmuls stay batched.
    for i in range(block_b):
        lo = i * seq_len
        s = lax.slice_in_dim(s_all, lo, lo + seq_len, axis=0)       # (S, P) f32
        x_i = lax.slice_in_dim(x2d, lo, lo + seq_len, axis=0)       # (S, E)
        p = jnp.exp(s - jnp.max(s, axis=0, keepdims=True))          # (S, P)
        inv = pl.reciprocal(jnp.sum(p, axis=0, keepdims=True), approx=True)
        p = (p * inv).astype(cd)                                    # normalized probs
        # ctx[q, e] = sum_s p[s, q] * x_i[s, e]   (TN matmul, f32 accumulation)
        ctx = lax.dot_general(p, x_i, (((0,), (0,)), ((), ())),
                              preferred_element_type=jnp.float32)   # (P, E)
        ctx_ref[pl.ds(i * num_queries, num_queries), :] = ctx.astype(cd)

    # Fused V + output projection applied once per grid step on (Bb*P, E),
    # then a single full-block store (no per-element partial stores).
    out = jnp.dot(ctx_ref[...], wvo_ref[...], preferred_element_type=jnp.float32)
    o_ref[...] = (out + bo_ref[...]).astype(o_ref.dtype)


def _sublane_multiple(dtype):
    # Minimal second-to-last tile: 8 for 4-byte, 16 for 2-byte, 32 for 1-byte dtypes.
    return max(8, 32 // jnp.dtype(dtype).itemsize)


def _choose_block_b(batch, seq, emb, pool, x_dtype, out_dtype, max_block_b=None,
                    *, target_block_bytes=4 << 20, max_unroll=32, min_grid=4):
    """Pick block_b: few-MiB x block, bounded unroll, >=min_grid steps when possible,
    and (block_b*S) / (block_b*P) aligned to the dtype sublane tile (BlockSpec legal)."""
    itemsize = jnp.dtype(x_dtype).itemsize
    desired = max(1, target_block_bytes // max(seq * emb * itemsize, 1))
    desired = min(desired, max_unroll)                 # bound the unrolled inner loop
    if max_block_b is not None:
        desired = min(desired, max_block_b)
    if batch >= min_grid:
        desired = min(desired, pl.cdiv(batch, min_grid))   # keep grid >= min_grid steps
    desired = min(desired, batch)

    ms_x = _sublane_multiple(x_dtype)                  # x block: (block_b*S, E)
    ms_o = _sublane_multiple(out_dtype)                # out block: (block_b*P, E)
    step_s = ms_x // math.gcd(seq, ms_x)
    step_p = ms_o // math.gcd(pool, ms_o)
    step = step_s * step_p // math.gcd(step_s, step_p)

    bb = (desired // step) * step
    if bb < step:
        bb = step
    if bb >= batch:
        bb = batch                                      # full-extent blocks: always legal
    return int(bb)


def multihead_pooling(x, queries, wq, wk, wv, wo, bq, bk, bv, bo,
                      *, compute_dtype=jnp.bfloat16, max_block_b=None):
    """x: (B, S, E); queries: (P, E); w*: (E, E) PyTorch layout (y = v @ W^T + b);
       b*: (E,). Returns (B, P*E) in x.dtype."""
    B, S, E = x.shape
    P = queries.shape[0]
    out_dtype = x.dtype

    # ---- Batch-invariant algebra, hoisted out of the kernel -------------------------
    # scores = ((q Wq^T + bq)/sqrt(E)) @ (x Wk^T + bk)^T : bk drops (softmax over S is
    # shift-invariant) and Wk folds into the tiny (P, E) query matrix.
    scale = 1.0 / math.sqrt(E)
    q_tilde = (((queries @ wq.T + bq) * scale) @ wk).astype(compute_dtype)   # (P, E)
    # out = softmax(scores) @ (x Wv^T + bv) @ Wo^T + bo
    #     = (softmax(scores) @ x) @ (Wv^T Wo^T) + (bv Wo^T + bo)   [rows sum to 1]
    wvo = (wv.T @ wo.T).astype(compute_dtype)                                # (E, E)
    bo2 = (bv @ wo.T + bo).reshape(1, E).astype(jnp.float32)                 # (1, E)

    # Flatten batch*seq so the in-kernel score matmul is a plain big-M 2-D matmul.
    x2d = x.reshape(B * S, E).astype(compute_dtype)

    block_b = _choose_block_b(B, S, E, P, compute_dtype, out_dtype, max_block_b)
    grid = (pl.cdiv(B, block_b),)   # non-divisor B -> Pallas masks/clips the tail block

    # ---- VMEM budget (actual working set, double-buffered pipelined operands) -------
    cb = jnp.dtype(compute_dtype).itemsize
    ob = jnp.dtype(out_dtype).itemsize
    work = (2 * block_b * S * E * cb             # x block (x2 pipeline buffers)
            + 2 * block_b * P * E * ob           # output block (x2 pipeline buffers)
            + block_b * P * E * cb               # ctx scratch
            + block_b * S * (P * 4 + E * cb)     # f32 scores + loop temporaries (rough)
            + 2 * (E * E + P * E) * cb + E * 4)  # Wvo, q~, bo'
    try:
        usable = int(pltpu.get_tpu_info().vmem_capacity_bytes * 3 // 4)   # v7x: ~48 MiB
    except Exception:
        usable = 48 << 20                        # conservative: fits v5e/v6e/v7x
    vmem_limit = int(min(max(2 * work, 16 << 20), usable))

    kernel = functools.partial(_mhp_kernel, block_b=block_b, seq_len=S, num_queries=P)

    out2d = pl.pallas_call(
        kernel,
        out_shape=jax.ShapeDtypeStruct((B * P, E), out_dtype),
        grid_spec=pltpu.PrefetchScalarGridSpec(
            num_scalar_prefetch=0,
            grid=grid,
            in_specs=[
                pl.BlockSpec((P, E), lambda b: (0, 0)),              # q~ (grid-invariant)
                pl.BlockSpec((block_b * S, E), lambda b: (b, 0)),    # x batch block
                pl.BlockSpec((E, E), lambda b: (0, 0)),              # Wvo (fused)
                pl.BlockSpec((1, E), lambda b: (0, 0)),              # bo' (fused bias)
            ],
            out_specs=pl.BlockSpec((block_b * P, E), lambda b: (b, 0)),
            scratch_shapes=[pltpu.VMEM((block_b * P, E), compute_dtype)],
        ),
        compiler_params=pltpu.CompilerParams(
            dimension_semantics=("parallel",),    # batch-block axis: megacore / 2-TC
            vmem_limit_bytes=vmem_limit,
        ),
    )(q_tilde, x2d, wvo, bo2)

    # (B*P, E) and (B, P*E) share the same row-major layout: free reshape.
    return out2d.reshape(B, P * E)


def reference(x, queries, wq, wk, wv, wo, bq, bk, bv, bo):
    B, S, E = x.shape
    q = jnp.broadcast_to(queries[None], (B,) + queries.shape)
    qp = q @ wq.T + bq
    kp = x @ wk.T + bk
    vp = x @ wv.T + bv
    s = jnp.einsum("bpe,bse->bps", qp, kp) / math.sqrt(E)
    a = jax.nn.softmax(s, axis=-1)
    o = jnp.einsum("bps,bse->bpe", a, vp)
    out = o @ wo.T + bo
    return out.reshape(B, -1)


if __name__ == "__main__":
    # Small shapes consistent with the module: embed_dim=32, pool_heads=2, S=8.
    B, S, E, P = 8, 8, 32, 2

    key = jax.random.PRNGKey(0)
    kx, kq, k1, k2, k3, k4, kx2 = jax.random.split(key, 7)

    x = jax.random.normal(kx, (B, S, E), dtype=jnp.float32)
    queries = jax.random.normal(kq, (P, E), dtype=jnp.float32)

    # Synthetic nn.MultiheadAttention parameters (in_proj split into Wq/Wk/Wv,
    # out_proj Wo) with non-trivial biases to exercise every bias-folding path.
    scale = 1.0 / math.sqrt(E)
    wq = jax.random.normal(k1, (E, E), dtype=jnp.float32) * scale
    wk = jax.random.normal(k2, (E, E), dtype=jnp.float32) * scale
    wv = jax.random.normal(k3, (E, E), dtype=jnp.float32) * scale
    wo = jax.random.normal(k4, (E, E), dtype=jnp.float32) * scale
    bq = jnp.full((E,), 0.01, jnp.float32)
    bk = jnp.full((E,), -0.02, jnp.float32)
    bv = jnp.full((E,), 0.03, jnp.float32)
    bo = jnp.full((E,), 0.05, jnp.float32)

    ref = reference(x, queries, wq, wk, wv, wo, bq, bk, bv, bo)

    # f32 compute path: validates the Q/Wk hoist, bk drop and Wo/bv fold (grid > 1).
    out_f32 = multihead_pooling(x, queries, wq, wk, wv, wo, bq, bk, bv, bo,
                                compute_dtype=jnp.float32, max_block_b=4)
    out_f32 = jax.block_until_ready(out_f32)
    assert out_f32.shape == (B, P * E)
    assert jnp.allclose(out_f32, ref, rtol=1e-2, atol=1e-2), \
        float(jnp.max(jnp.abs(out_f32 - ref)))

    # bf16 compute path (the optimized production configuration).
    out_bf16 = multihead_pooling(x, queries, wq, wk, wv, wo, bq, bk, bv, bo,
                                 compute_dtype=jnp.bfloat16, max_block_b=4)
    out_bf16 = jax.block_until_ready(out_bf16)
    assert out_bf16.shape == (B, P * E)
    assert jnp.allclose(out_bf16, ref, rtol=5e-2, atol=5e-2), \
        float(jnp.max(jnp.abs(out_bf16 - ref)))

    # Tail handling: batch not divisible by the batch block (cdiv grid + masked tail).
    Bt = 10
    xt = jax.random.normal(kx2, (Bt, S, E), dtype=jnp.float32)
    ref_t = reference(xt, queries, wq, wk, wv, wo, bq, bk, bv, bo)
    out_t = multihead_pooling(xt, queries, wq, wk, wv, wo, bq, bk, bv, bo,
                              compute_dtype=jnp.float32, max_block_b=4)
    out_t = jax.block_until_ready(out_t)
    assert out_t.shape == (Bt, P * E)
    assert jnp.allclose(out_t, ref_t, rtol=1e-2, atol=1e-2), \
        float(jnp.max(jnp.abs(out_t - ref_t)))

    print("KERNEL_OK")
</pallas_src>

<mosaic_0001>
module attributes {stable_mosaic.version = 11 : i64} {
  func.func @_mhp_kernel(%arg0: i32, %arg1: memref<2x32xf32, #tpu.memory_space<vmem>>, %arg2: memref<32x32xf32, #tpu.memory_space<vmem>>, %arg3: memref<32x32xf32, #tpu.memory_space<vmem>>, %arg4: memref<1x32xf32, #tpu.memory_space<vmem>>, %arg5: memref<8x32xf32, #tpu.memory_space<vmem>>, %arg6: memref<8x32xf32, #tpu.memory_space<vmem>>) attributes {dimension_semantics = [#tpu.dimension_semantics<parallel>], iteration_bounds = array<i64: 2>, scalar_prefetch = 0 : i64, scratch_operands = 1 : i64, tpu.core_type = #tpu.core_type<tc>, window_params = [{pipeline_mode = #tpu.pipeline_mode<synchronous>, transform_indices = @transform_0, window_bounds = array<i64: 2, 32>}, {transform_indices = @transform_1, window_bounds = array<i64: 32, 32>}, {pipeline_mode = #tpu.pipeline_mode<synchronous>, transform_indices = @transform_2, window_bounds = array<i64: 32, 32>}, {pipeline_mode = #tpu.pipeline_mode<synchronous>, transform_indices = @transform_3, window_bounds = array<i64: 1, 32>}, {transform_indices = @transform_4, window_bounds = array<i64: 8, 32>}]} {
    %c0 = arith.constant 0 : index
    %c0_0 = arith.constant 0 : index
    %0 = vector.load %arg2[%c0, %c0_0] : memref<32x32xf32, #tpu.memory_space<vmem>>, vector<32x32xf32>
    %c0_1 = arith.constant 0 : index
    %c0_2 = arith.constant 0 : index
    %1 = vector.load %arg1[%c0_1, %c0_2] : memref<2x32xf32, #tpu.memory_space<vmem>>, vector<2x32xf32>
    %cst = arith.constant dense<0.000000e+00> : vector<32x2xf32>
    %2 = tpu.matmul %0, %1, %cst {dimension_numbers = #tpu.dot_dimension_numbers<[1], [1], [0], [0], [0, 0, 1, 0], [], []>} : vector<32x32xf32>, vector<2x32xf32>, vector<32x2xf32> -> vector<32x2xf32>
    %3 = vector.extract_strided_slice %2 {offsets = [0, 0], sizes = [8, 2], strides = [1, 1]} : vector<32x2xf32> to vector<8x2xf32>
    %4 = vector.extract_strided_slice %0 {offsets = [0, 0], sizes = [8, 32], strides = [1, 1]} : vector<32x32xf32> to vector<8x32xf32>
    %cst_3 = arith.constant dense<0xFF800000> : vector<2xf32>
    %5 = vector.multi_reduction <maximumf>, %3, %cst_3 [0] : vector<8x2xf32> to vector<2xf32>
    %6 = vector.shape_cast %5 : vector<2xf32> to vector<1x2xf32>
    %7 = vector.broadcast %6 : vector<1x2xf32> to vector<8x2xf32>
    %8 = arith.subf %3, %7 : vector<8x2xf32>
    %9 = math.exp %8 : vector<8x2xf32>
    %cst_4 = arith.constant dense<0.000000e+00> : vector<2xf32>
    %10 = vector.multi_reduction <add>, %9, %cst_4 [0] : vector<8x2xf32> to vector<2xf32>
    %11 = vector.shape_cast %10 : vector<2xf32> to vector<1x2xf32>
    %12 = tpu.reciprocal %11 {approx = true} : vector<1x2xf32> -> vector<1x2xf32>
    %13 = vector.broadcast %12 : vector<1x2xf32> to vector<8x2xf32>
    %14 = arith.mulf %9, %13 : vector<8x2xf32>
    %cst_5 = arith.constant dense<0.000000e+00> : vector<2x32xf32>
    %15 = tpu.matmul %14, %4, %cst_5 {dimension_numbers = #tpu.dot_dimension_numbers<[0], [0], [1], [1], [0, 1, 1, 1], [], []>} : vector<8x2xf32>, vector<8x32xf32>, vector<2x32xf32> -> vector<2x32xf32>
    %c0_6 = arith.constant 0 : index
    %c0_7 = arith.constant 0 : index
    %16 = vector.load %arg6[%c0_6, %c0_7] : memref<8x32xf32, #tpu.memory_space<vmem>>, vector<2x32xf32>
    tpu.vector_store %arg6[%c0_6, %c0_7], %15 {strides = array<i32>} : memref<8x32xf32, #tpu.memory_space<vmem>>, vector<2x32xf32>,
    %17 = vector.extract_strided_slice %2 {offsets = [8, 0], sizes = [8, 2], strides = [1, 1]} : vector<32x2xf32> to vector<8x2xf32>
    %18 = vector.extract_strided_slice %0 {offsets = [8, 0], sizes = [8, 32], strides = [1, 1]} : vector<32x32xf32> to vector<8x32xf32>
    %cst_8 = arith.constant dense<0xFF800000> : vector<2xf32>
    %19 = vector.multi_reduction <maximumf>, %17, %cst_8 [0] : vector<8x2xf32> to vector<2xf32>
    %20 = vector.shape_cast %19 : vector<2xf32> to vector<1x2xf32>
    %21 = vector.broadcast %20 : vector<1x2xf32> to vector<8x2xf32>
    %22 = arith.subf %17, %21 : vector<8x2xf32>
    %23 = math.exp %22 : vector<8x2xf32>
    %cst_9 = arith.constant dense<0.000000e+00> : vector<2xf32>
    %24 = vector.multi_reduction <add>, %23, %cst_9 [0] : vector<8x2xf32> to vector<2xf32>
    %25 = vector.shape_cast %24 : vector<2xf32> to vector<1x2xf32>
    %26 = tpu.reciprocal %25 {approx = true} : vector<1x2xf32> -> vector<1x2xf32>
    %27 = vector.broadcast %26 : vector<1x2xf32> to vector<8x2xf32>
    %28 = arith.mulf %23, %27 : vector<8x2xf32>
    %cst_10 = arith.constant dense<0.000000e+00> : vector<2x32xf32>
    %29 = tpu.matmul %28, %18, %cst_10 {dimension_numbers = #tpu.dot_dimension_numbers<[0], [0], [1], [1], [0, 1, 1, 1], [], []>} : vector<8x2xf32>, vector<8x32xf32>, vector<2x32xf32> -> vector<2x32xf32>
    %c2 = arith.constant 2 : index
    %c0_11 = arith.constant 0 : index
    %30 = vector.load %arg6[%c2, %c0_11] : memref<8x32xf32, #tpu.memory_space<vmem>>, vector<2x32xf32>
    tpu.vector_store %arg6[%c2, %c0_11], %29 {strides = array<i32>} : memref<8x32xf32, #tpu.memory_space<vmem>>, vector<2x32xf32>,
    %31 = vector.extract_strided_slice %2 {offsets = [16, 0], sizes = [8, 2], strides = [1, 1]} : vector<32x2xf32> to vector<8x2xf32>
    %32 = vector.extract_strided_slice %0 {offsets = [16, 0], sizes = [8, 32], strides = [1, 1]} : vector<32x32xf32> to vector<8x32xf32>
    %cst_12 = arith.constant dense<0xFF800000> : vector<2xf32>
    %33 = vector.multi_reduction <maximumf>, %31, %cst_12 [0] : vector<8x2xf32> to vector<2xf32>
    %34 = vector.shape_cast %33 : vector<2xf32> to vector<1x2xf32>
    %35 = vector.broadcast %34 : vector<1x2xf32> to vector<8x2xf32>
    %36 = arith.subf %31, %35 : vector<8x2xf32>
    %37 = math.exp %36 : vector<8x2xf32>
    %cst_13 = arith.constant dense<0.000000e+00> : vector<2xf32>
    %38 = vector.multi_reduction <add>, %37, %cst_13 [0] : vector<8x2xf32> to vector<2xf32>
    %39 = vector.shape_cast %38 : vector<2xf32> to vector<1x2xf32>
    %40 = tpu.reciprocal %39 {approx = true} : vector<1x2xf32> -> vector<1x2xf32>
    %41 = vector.broadcast %40 : vector<1x2xf32> to vector<8x2xf32>
    %42 = arith.mulf %37, %41 : vector<8x2xf32>
    %cst_14 = arith.constant dense<0.000000e+00> : vector<2x32xf32>
    %43 = tpu.matmul %42, %32, %cst_14 {dimension_numbers = #tpu.dot_dimension_numbers<[0], [0], [1], [1], [0, 1, 1, 1], [], []>} : vector<8x2xf32>, vector<8x32xf32>, vector<2x32xf32> -> vector<2x32xf32>
    %c4 = arith.constant 4 : index
    %c0_15 = arith.constant 0 : index
    %44 = vector.load %arg6[%c4, %c0_15] : memref<8x32xf32, #tpu.memory_space<vmem>>, vector<2x32xf32>
    tpu.vector_store %arg6[%c4, %c0_15], %43 {strides = array<i32>} : memref<8x32xf32, #tpu.memory_space<vmem>>, vector<2x32xf32>,
    %45 = vector.extract_strided_slice %2 {offsets = [24, 0], sizes = [8, 2], strides = [1, 1]} : vector<32x2xf32> to vector<8x2xf32>
    %46 = vector.extract_strided_slice %0 {offsets = [24, 0], sizes = [8, 32], strides = [1, 1]} : vector<32x32xf32> to vector<8x32xf32>
    %cst_16 = arith.constant dense<0xFF800000> : vector<2xf32>
    %47 = vector.multi_reduction <maximumf>, %45, %cst_16 [0] : vector<8x2xf32> to vector<2xf32>
    %48 = vector.shape_cast %47 : vector<2xf32> to vector<1x2xf32>
    %49 = vector.broadcast %48 : vector<1x2xf32> to vector<8x2xf32>
    %50 = arith.subf %45, %49 : vector<8x2xf32>
    %51 = math.exp %50 : vector<8x2xf32>
    %cst_17 = arith.constant dense<0.000000e+00> : vector<2xf32>
    %52 = vector.multi_reduction <add>, %51, %cst_17 [0] : vector<8x2xf32> to vector<2xf32>
    %53 = vector.shape_cast %52 : vector<2xf32> to vector<1x2xf32>
    %54 = tpu.reciprocal %53 {approx = true} : vector<1x2xf32> -> vector<1x2xf32>
    %55 = vector.broadcast %54 : vector<1x2xf32> to vector<8x2xf32>
    %56 = arith.mulf %51, %55 : vector<8x2xf32>
    %cst_18 = arith.constant dense<0.000000e+00> : vector<2x32xf32>
    %57 = tpu.matmul %56, %46, %cst_18 {dimension_numbers = #tpu.dot_dimension_numbers<[0], [0], [1], [1], [0, 1, 1, 1], [], []>} : vector<8x2xf32>, vector<8x32xf32>, vector<2x32xf32> -> vector<2x32xf32>
    %c6 = arith.constant 6 : index
    %c0_19 = arith.constant 0 : index
    %58 = vector.load %arg6[%c6, %c0_19] : memref<8x32xf32, #tpu.memory_space<vmem>>, vector<2x32xf32>
    tpu.vector_store %arg6[%c6, %c0_19], %57 {strides = array<i32>} : memref<8x32xf32, #tpu.memory_space<vmem>>, vector<2x32xf32>,
    %c0_20 = arith.constant 0 : index
    %c0_21 = arith.constant 0 : index
    %59 = vector.load %arg6[%c0_20, %c0_21] : memref<8x32xf32, #tpu.memory_space<vmem>>, vector<8x32xf32>
    %c0_22 = arith.constant 0 : index
    %c0_23 = arith.constant 0 : index
    %60 = vector.load %arg3[%c0_22, %c0_23] : memref<32x32xf32, #tpu.memory_space<vmem>>, vector<32x32xf32>
    %cst_24 = arith.constant dense<0.000000e+00> : vector<8x32xf32>
    %61 = tpu.matmul %59, %60, %cst_24 {dimension_numbers = #tpu.dot_dimension_numbers<[1], [0], [0], [1], [0, 0, 1, 1], [], []>} : vector<8x32xf32>, vector<32x32xf32>, vector<8x32xf32> -> vector<8x32xf32>
    %c0_25 = arith.constant 0 : index
    %c0_26 = arith.constant 0 : index
    %62 = vector.load %arg4[%c0_25, %c0_26] : memref<1x32xf32, #tpu.memory_space<vmem>>, vector<1x32xf32>
    %63 = vector.broadcast %62 : vector<1x32xf32> to vector<8x32xf32>
    %64 = arith.addf %61, %63 : vector<8x32xf32>
    %c0_27 = arith.constant 0 : index
    %c0_28 = arith.constant 0 : index
    %65 = vector.load %arg5[%c0_27, %c0_28] : memref<8x32xf32, #tpu.memory_space<vmem>>, vector<8x32xf32>
    tpu.vector_store %arg5[%c0_27, %c0_28], %64 {strides = array<i32>} : memref<8x32xf32, #tpu.memory_space<vmem>>, vector<8x32xf32>,
    return
  }
  func.func @transform_0(%arg0: i32) -> (i32, i32) {
    %c0_i32 = arith.constant 0 : i32
    %c0_i32_0 = arith.constant 0 : i32
    %c0_i32_1 = arith.constant 0 : i32
    return %c0_i32, %c0_i32_0 : i32, i32
  }
  func.func @transform_1(%arg0: i32) -> (i32, i32) {
    %c0_i32 = arith.constant 0 : i32
    %c0_i32_0 = arith.constant 0 : i32
    return %arg0, %c0_i32 : i32, i32
  }
  func.func @transform_2(%arg0: i32) -> (i32, i32) {
    %c0_i32 = arith.constant 0 : i32
    %c0_i32_0 = arith.constant 0 : i32
    %c0_i32_1 = arith.constant 0 : i32
    return %c0_i32, %c0_i32_0 : i32, i32
  }
  func.func @transform_3(%arg0: i32) -> (i32, i32) {
    %c0_i32 = arith.constant 0 : i32
    %c0_i32_0 = arith.constant 0 : i32
    %c0_i32_1 = arith.constant 0 : i32
    return %c0_i32, %c0_i32_0 : i32, i32
  }
  func.func @transform_4(%arg0: i32) -> (i32, i32) {
    %c0_i32 = arith.constant 0 : i32
    %c0_i32_0 = arith.constant 0 : i32
    return %arg0, %c0_i32 : i32, i32
  }
}

</mosaic_0001>

<llo_original>
// kernel: tpu_custom_call.1
$region0: #{tpu_custom_call.1}
  #allocation0 [shape = 'u32[]', space=smem, size = 0x4, offset = 0x4, fixed_abs, tag = 'smem constant byte address 0x4 - core index']
  #allocation1 [shape = 'u32[144,128]{1,0:T(1,128)}', space=vmem, size = 0x12000, scoped, tag = 'internal scratch']
  #allocation2 [shape = 'f32[8,32]{1,0:T(8,128)}', space=vmem, size = 0x1000, scoped, tag = 'scratch operand']
  %s0 = inlined_call_operand.vmem [shape: f32[2,32], index: 0, kind: input, shape index: {}]
  %s1 = inlined_call_operand.vmem [shape: f32[64,32], index: 1, kind: input, shape index: {}]
  %s2 = inlined_call_operand.vmem [shape: f32[32,32], index: 2, kind: input, shape index: {}]
  %s3 = inlined_call_operand.vmem [shape: f32[1,32], index: 3, kind: input, shape index: {}]
  %s4 = inlined_call_operand.hbm [shape: f32[16,32], index: 4, kind: output, shape index: {}]
  %s5 = sld [smem:[#allocation0]]
  $region49: #{tpu_custom_call.1} parent=0
    _
  %s7 = ssub.s32 1, %s5
  %s8 = scalar_select 0, %s7, %s5
  $region1: #{tpu_custom_call.1} parent=0
    #allocation3 [shape = 'u8[8192]{0}', space=vmem, size = 0x2000, scoped, tag = 'output window, operand 0']
    #allocation4 [shape = 's32[2]{0}', space=sflag, size = 0x8, scoped, tag = 'scoped memory for tpu_custom_call.1']
    %9 = vsyncpa [#allocation4], 0
    %s10 = scalar_lea.sflag [#allocation4], 1
    %11 = vsyncpa %s10, 0
    loop: start=0, step=1, limit=4
    $region2: #{tpu_custom_call.1} parent=1 // loop_pre_header
      _
    $region3: #{tpu_custom_call.1} parent=1 // loop_header
      %s13 = sphi 0, %s17
      %p14 = scmp.ge.s32.totalorder %s13, 4
      %s21 = sphi 0, %s21
      %s23 = sphi 0, %s21
      %s24 = sphi 0, %s23
      %s38 = sphi 0, %s24
      %s44 = sphi 0, %s46
      %s47 = sphi 0, %s44
      %s48 = sphi 0, %s47
      %s64 = sphi 0, %s48
      %s68 = sphi 0, %s68
      %s70 = sphi 0, %s68
      %s71 = sphi 0, %s70
      %s85 = sphi 0, %s71
      %s89 = sphi 0, %s89
      %s91 = sphi 0, %s89
      %s92 = sphi 0, %s91
      %s106 = sphi 0, %s92
      %s112 = sphi 0, %s114
      %s115 = sphi 0, %s112
      %s116 = sphi 0, %s115
      %s132 = sphi 0, %s116
    $region4: #{tpu_custom_call.1} parent=1 // loop_header_branch
      %16 = sbr.rel (%p14) target = $region8
    $region5: #{tpu_custom_call.1} parent=1 // loop_body
      %s18 = ssub.s32 %s13, 1
      %s19 = ssub.s32 %s13, 2
      %s20 = sadd.s32 %s13, 1
      %s22 = sadd.s32 %s21, 1
      %p25 = scmp.eq.s32.totalorder %s13, 1
      %p26 = scmp.ne.s32.totalorder %s21, %s23
      %p27 = scmp.eq.s32.totalorder %s13, 0
      %p28 = por %p26, %p27
      %p29 = scmp.ne.s32.totalorder %s21, %s23
      %p30 = scmp.eq.s32.totalorder %s18, 1
      %p31 = por %p29, %p30
      %p32 = scmp.ne.s32.totalorder %s23, %s24
      %p33 = scmp.eq.s32.totalorder %s18, 0
      %p34 = por %p32, %p33
      %p35 = scmp.ne.s32.totalorder %s23, %s24
      %p36 = scmp.eq.s32.totalorder %s19, 1
      %p37 = por %p35, %p36
      %p39 = scmp.ne.s32.totalorder %s24, %s38
      %p40 = scmp.eq.s32.totalorder %s19, 0
      %p41 = por %p39, %p40
      %s42 = ssub.s32 %s13, %s20
      %p43 = scmp.eq.s32.totalorder %s42, 0
      %s45 = sadd.s32 %s44, 1
      %s46 = scalar_select %p43, %s44, %s45
      %p49 = pneg %p43
      %p50 = scmp.eq.s32.totalorder %s13, 1
      %p51 = por %p49, %p50
      %p52 = scmp.ne.s32.totalorder %s44, %s47
      %p53 = scmp.eq.s32.totalorder %s13, 0
      %p54 = por %p52, %p53
      %p55 = scmp.ne.s32.totalorder %s44, %s47
      %p56 = scmp.eq.s32.totalorder %s18, 1
      %p57 = por %p55, %p56
      %p58 = scmp.ne.s32.totalorder %s47, %s48
      %p59 = scmp.eq.s32.totalorder %s18, 0
      %p60 = por %p58, %p59
      %p61 = scmp.ne.s32.totalorder %s47, %s48
      %p62 = scmp.eq.s32.totalorder %s19, 1
      %p63 = por %p61, %p62
      %p65 = scmp.ne.s32.totalorder %s48, %s64
      %p66 = scmp.eq.s32.totalorder %s19, 0
      %p67 = por %p65, %p66
      %s69 = sadd.s32 %s68, 1
      %p72 = scmp.eq.s32.totalorder %s13, 1
      %p73 = scmp.ne.s32.totalorder %s68, %s70
      %p74 = scmp.eq.s32.totalorder %s13, 0
      %p75 = por %p73, %p74
      %p76 = scmp.ne.s32.totalorder %s68, %s70
      %p77 = scmp.eq.s32.totalorder %s18, 1
      %p78 = por %p76, %p77
      %p79 = scmp.ne.s32.totalorder %s70, %s71
      %p80 = scmp.eq.s32.totalorder %s18, 0
      %p81 = por %p79, %p80
      %p82 = scmp.ne.s32.totalorder %s70, %s71
      %p83 = scmp.eq.s32.totalorder %s19, 1
      %p84 = por %p82, %p83
      %p86 = scmp.ne.s32.totalorder %s71, %s85
      %p87 = scmp.eq.s32.totalorder %s19, 0
      %p88 = por %p86, %p87
      %s90 = sadd.s32 %s89, 1
      %p93 = scmp.eq.s32.totalorder %s13, 1
      %p94 = scmp.ne.s32.totalorder %s89, %s91
      %p95 = scmp.eq.s32.totalorder %s13, 0
      %p96 = por %p94, %p95
      %p97 = scmp.ne.s32.totalorder %s89, %s91
      %p98 = scmp.eq.s32.totalorder %s18, 1
      %p99 = por %p97, %p98
      %p100 = scmp.ne.s32.totalorder %s91, %s92
      %p101 = scmp.eq.s32.totalorder %s18, 0
      %p102 = por %p100, %p101
      %p103 = scmp.ne.s32.totalorder %s91, %s92
      %p104 = scmp.eq.s32.totalorder %s19, 1
      %p105 = por %p103, %p104
      %p107 = scmp.ne.s32.totalorder %s92, %s106
      %p108 = scmp.eq.s32.totalorder %s19, 0
      %p109 = por %p107, %p108
      %s110 = ssub.s32 %s13, %s20
      %p111 = scmp.eq.s32.totalorder %s110, 0
      %s113 = sadd.s32 %s112, 1
      %s114 = scalar_select %p111, %s112, %s113
      %p117 = pneg %p111
      %p118 = scmp.eq.s32.totalorder %s13, 1
      %p119 = por %p117, %p118
      %p120 = scmp.ne.s32.totalorder %s112, %s115
      %p121 = scmp.eq.s32.totalorder %s13, 0
      %p122 = por %p120, %p121
      %p123 = scmp.ne.s32.totalorder %s112, %s115
      %p124 = scmp.eq.s32.totalorder %s18, 1
      %p125 = por %p123, %p124
      %p126 = scmp.ne.s32.totalorder %s115, %s116
      %p127 = scmp.eq.s32.totalorder %s18, 0
      %p128 = por %p126, %p127
      %p129 = scmp.ne.s32.totalorder %s115, %s116
      %p130 = scmp.eq.s32.totalorder %s19, 1
      %p131 = por %p129, %p130
      %p133 = scmp.ne.s32.totalorder %s116, %s132
      %p134 = scmp.eq.s32.totalorder %s19, 0
      %p135 = por %p133, %p134
      %p136 = scmp.le.s32.totalorder 1, %s13
      %p137 = scmp.lt.s32.totalorder %s13, 3
      %p138 = pnand %p136, %p137
      %p139 = pneg %p138
      // Predicated region
      $region9: #{tpu_custom_call.1} parent=5 // pred_check
        _
      $region10: #{tpu_custom_call.1} parent=5 // pred_check_branch
        %141 = sbr.rel (%p138) target = $region12
      $region11: #{tpu_custom_call.1} parent=5 // pred_region
        %s142 = ssub.s32 %s13, 1
        // Predicated region
        $region13: #{tpu_custom_call.1} parent=11 // pred_check
          %p143 = pneg %p34
        $region14: #{tpu_custom_call.1} parent=11 // pred_check_branch
          %145 = sbr.rel (%p143) target = $region16
        $region15: #{tpu_custom_call.1} parent=11 // pred_region
          _
        $region16: #{tpu_custom_call.1} parent=11 // pred_fallthru
          _
        // Predicated region
        $region17: #{tpu_custom_call.1} parent=11 // pred_check
          %p146 = pneg %p81
        $region18: #{tpu_custom_call.1} parent=11 // pred_check_branch
          %148 = sbr.rel (%p146) target = $region20
        $region19: #{tpu_custom_call.1} parent=11 // pred_region
          _
        $region20: #{tpu_custom_call.1} parent=11 // pred_fallthru
          _
        // Predicated region
        $region21: #{tpu_custom_call.1} parent=11 // pred_check
          %p149 = pneg %p102
        $region22: #{tpu_custom_call.1} parent=11 // pred_check_branch
          %151 = sbr.rel (%p149) target = $region24
        $region23: #{tpu_custom_call.1} parent=11 // pred_region
          _
        $region24: #{tpu_custom_call.1} parent=11 // pred_fallthru
          _
      $region12: #{tpu_custom_call.1} parent=5 // pred_fallthru
        _
      %p152 = scmp.lt.s32.totalorder %s13, 2
      // Predicated region
      $region25: #{tpu_custom_call.1} parent=5 // pred_check
        %p153 = pneg %p152
      $region26: #{tpu_custom_call.1} parent=5 // pred_check_branch
        %155 = sbr.rel (%p153) target = $region28
      $region27: #{tpu_custom_call.1} parent=5 // pred_region
        // Predicated region
        $region29: #{tpu_custom_call.1} parent=27 // pred_check
          %p156 = pneg %p54
        $region30: #{tpu_custom_call.1} parent=27 // pred_check_branch
          %158 = sbr.rel (%p156) target = $region32
        $region31: #{tpu_custom_call.1} parent=27 // pred_region
          %s159 = smul.u32 4, %s13
          %p160 = scmp.lt.s32.totalorder %s159, 7
          %s161 = scalar_select %p160, %s159, 7
          %s162 = smul.addr %s161, 8
          %s163 = scalar_lea.vmem %s1, %s162
          %s164 = smul.u32 4, %s13
        $region32: #{tpu_custom_call.1} parent=27 // pred_fallthru
          _
      $region28: #{tpu_custom_call.1} parent=5 // pred_fallthru
        _
      %p165 = scmp.le.s32.totalorder 1, %s13
      %p166 = scmp.lt.s32.totalorder %s13, 3
      %p167 = pnand %p165, %p166
      %p168 = pneg %p167
      // Predicated region
      $region33: #{tpu_custom_call.1} parent=5 // pred_check
        _
      $region34: #{tpu_custom_call.1} parent=5 // pred_check_branch
        %170 = sbr.rel (%p167) target = $region36
      $region35: #{tpu_custom_call.1} parent=5 // pred_region
        %s171 = ssub.s32 %s13, 1
        %p172 = pneg %p34
        %p173 = pneg %p31
        %s174 = smul.u32 4, %s18
        %p175 = scmp.lt.s32.totalorder %s174, 7
        %s176 = scalar_select %p175, %s174, 7
        %s177 = smul.addr %s176, 8
        %s178 = scalar_lea.vmem %s1, %s177
        %p179 = pneg %p60
        %p180 = pneg %p57
        %p181 = pneg %p81
        %p182 = pneg %p78
        %p183 = pneg %p102
        %p184 = pneg %p99
        %p185 = pneg %p128
        %p186 = pneg %p125
        %s187 = sand.u32 %s115, 1
        %s188 = scalar_lea.sflag [#allocation4], %s187
        %s189 = sand.u32 %s115, 1
        %s190 = smul.addr %s189, 8
        %s191 = scalar_lea.vmem [#allocation3], %s190
        %s192 = smul.u32 4, %s18
        %p193 = scmp.lt.s32.totalorder %s192, 7
        %s194 = scalar_select %p193, %s192, 7
        %s195 = smul.addr %s194, 8
        %s196 = scalar_lea.vmem %s1, %s195
        %s197 = smul.u32 4, %s18
        %v198 = vld [vmem:[%s196] sm:$0xff]
        %v199 = vld [vmem:[%s196 + $0x8] sm:$0xff]
        %v200 = vld [vmem:[%s196 + $0x10] sm:$0xff]
        %v201 = vld [vmem:[%s196 + $0x18] sm:$0xff]
        %v202 = vld [vmem:[%s0] sm:$0x3]
        %vm203 = vcmask 261120
        %v205 = vsel %vm203, %v198, 0
        %v208 = vsel %vm203, %v199, 0
        %v211 = vsel %vm203, %v200, 0
        %v214 = vsel %vm203, %v201, 0
        %v217 = vsel %vm203, %v202, 0
        %219 = vmatprep.subr.mxu0 0.0
        %220 = vmatpush1.xpose.msra.mxu0 0.0
        %221 = vmatprep.subr.mxu0 0.0
        %222 = vmatpush1.xpose.msra.mxu0 0.0
        %223 = vmatprep.subr.mxu0 0.0
        %224 = vmatpush1.xpose.msra.mxu0 0.0
        %225 = vmatprep.subr.mxu0 0.0
        %226 = vmatpush1.xpose.msra.mxu0 0.0
        %227 = vmatprep.subr.mxu0 0.0
        %228 = vmatpush1.xpose.msra.mxu0 0.0
        %229 = vmatprep.subr.mxu0 0.0
        %230 = vmatpush1.xpose.msra.mxu0 0.0
        %231 = vmatprep.subr.mxu0 0.0
        %232 = vmatpush1.xpose.msra.mxu0 0.0
        %233 = vmatprep.subr.mxu0 0.0
        %234 = vmatpush1.xpose.msra.mxu0 0.0
        %235 = vmatprep.subr.mxu0 0.0
        %236 = vmatpush1.xpose.msra.mxu0 0.0
        %237 = vmatprep.subr.mxu0 0.0
        %238 = vmatpush1.xpose.msra.mxu0 0.0
        %239 = vmatprep.subr.mxu0 0.0
        %240 = vmatpush1.xpose.msra.mxu0 0.0
        %241 = vmatprep.subr.mxu0 0.0
        %242 = vmatpush1.xpose.msra.mxu0 0.0
        %243 = vmatprep.subr.mxu0 0.0
        %244 = vmatpush1.xpose.msra.mxu0 0.0
        %245 = vmatprep.subr.mxu0 0.0
        %246 = vmatpush1.xpose.msra.mxu0 0.0
        %247 = vmatprep.subr.mxu0 0.0
        %248 = vmatpush1.xpose.msra.mxu0 0.0
        %249 = vmatprep.subr.mxu0 0.0
        %250 = vmatpush1.xpose.msra.mxu0 %v217
        %251 = vmatprep.subr.mxu0 0.0
        %252 = vmatpush2.xpose.msra.mxu0 0.0
        %253 = vmatprep.subr.mxu0 0.0
        %254 = vmatpush2.xpose.msra.mxu0 0.0
        %255 = vmatprep.subr.mxu0 0.0
        %256 = vmatpush2.xpose.msra.mxu0 0.0
        %257 = vmatprep.subr.mxu0 0.0
        %258 = vmatpush2.xpose.msra.mxu0 0.0
        %259 = vmatprep.subr.mxu0 0.0
        %260 = vmatpush2.xpose.msra.mxu0 0.0
        %261 = vmatprep.subr.mxu0 0.0
        %262 = vmatpush2.xpose.msra.mxu0 0.0
        %263 = vmatprep.subr.mxu0 0.0
        %264 = vmatpush2.xpose.msra.mxu0 0.0
        %265 = vmatprep.subr.mxu0 0.0
        %266 = vmatpush2.xpose.msra.mxu0 0.0
        %267 = vmatprep.subr.mxu0 0.0
        %268 = vmatpush2.xpose.msra.mxu0 0.0
        %269 = vmatprep.subr.mxu0 0.0
        %270 = vmatpush2.xpose.msra.mxu0 0.0
        %271 = vmatprep.subr.mxu0 0.0
        %272 = vmatpush2.xpose.msra.mxu0 0.0
        %273 = vmatprep.subr.mxu0 0.0
        %274 = vmatpush2.xpose.msra.mxu0 0.0
        %275 = vmatprep.subr.mxu0 0.0
        %276 = vmatpush2.xpose.msra.mxu0 0.0
        %277 = vmatprep.subr.mxu0 0.0
        %278 = vmatpush2.xpose.msra.mxu0 0.0
        %279 = vmatprep.subr.mxu0 0.0
        %280 = vmatpush2.xpose.msra.mxu0 0.0
        %281 = vmatprep.subr.mxu0 0.0
        %282 = vmatpush2.xpose.msra.mxu0 0.0
        %283 = vmatprep.mubr.f32.mxu0 0.0
        %284 = vmatmul.mubr.f32.gmra.mxu0 %v205
        %v285 = vpop.f32.mrf.mxu0
        %v286 = vadd.f32 0.0, %v285
        %v287 = vpop.f32.mrf.mxu0
        %288 = vmatprep.mubr.f32.mxu0 0.0
        %289 = vmatmul.mubr.f32.gmra.mxu0 %v208
        %v290 = vpop.f32.mrf.mxu0
        %v291 = vadd.f32 0.0, %v290
        %v292 = vpop.f32.mrf.mxu0
        %293 = vmatprep.mubr.f32.mxu0 0.0
        %294 = vmatmul.mubr.f32.gmra.mxu0 %v211
        %v295 = vpop.f32.mrf.mxu0
        %v296 = vadd.f32 0.0, %v295
        %v297 = vpop.f32.mrf.mxu0
        %298 = vmatprep.mubr.f32.mxu0 0.0
        %299 = vmatmul.mubr.f32.gmra.mxu0 %v214
        %v300 = vpop.f32.mrf.mxu0
        %v301 = vadd.f32 0.0, %v300
        %v302 = vpop.f32.mrf.mxu0
        %303 = vdwg.mxu0
        %vm304 = vcmask 15360
        %v305 = vsel %vm304, %v286, -inf
        %v306 = vrot.slane %v305, 4
        %v307 = vmax.f32 %v305, %v306
        %v308 = vrot.slane %v307, 2
        %v309 = vmax.f32 %v307, %v308
        %v310 = vrot.slane %v309, 1
        %v311 = vmax.f32 %v309, %v310
        %v312 = vsub.f32 %v286, %v311
        %v313 = vmul.f32 %v312, 1.442695
        %v314 = vpow.pop %v313
        %v315 = vsel %vm304, %v314, 0.0
        %v316 = vrot.slane %v315, 4
        %v317 = vadd.f32 %v315, %v316
        %v318 = vrot.slane %v317, 2
        %v319 = vadd.f32 %v317, %v318
        %v320 = vrot.slane %v319, 1
        %v321 = vadd.f32 %v319, %v320
        %v322 = vrcp.pop %v321
        %v323 = vmul.f32 %v314, %v322
        %324 = vxpose.xlu0.b32.start [1/16] %v323, 128
        %325 = vxpose.xlu0.b32.cont [2/16] 0.0, 128
        %326 = vxpose.xlu0.b32.cont [3/16] 0.0, 128
        %327 = vxpose.xlu0.b32.cont [4/16] 0.0, 128
        %328 = vxpose.xlu0.b32.cont [5/16] 0.0, 128
        %329 = vxpose.xlu0.b32.cont [6/16] 0.0, 128
        %330 = vxpose.xlu0.b32.cont [7/16] 0.0, 128
        %331 = vxpose.xlu0.b32.cont [8/16] 0.0, 128
        %332 = vxpose.xlu0.b32.cont [9/16] 0.0, 128
        %333 = vxpose.xlu0.b32.cont [10/16] 0.0, 128
        %334 = vxpose.xlu0.b32.cont [11/16] 0.0, 128
        %335 = vxpose.xlu0.b32.cont [12/16] 0.0, 128
        %336 = vxpose.xlu0.b32.cont [13/16] 0.0, 128
        %337 = vxpose.xlu0.b32.cont [14/16] 0.0, 128
        %338 = vxpose.xlu0.b32.cont [15/16] 0.0, 128
        %339 = vxpose.xlu0.b32.end [16/16] 0.0, 128
        %v340 = vpop.trf.xlu0
        %v341 = vpop.trf.xlu0
        %v342 = vpop.trf.xlu0
        %v343 = vpop.trf.xlu0
        %v344 = vpop.trf.xlu0
        %v345 = vpop.trf.xlu0
        %v346 = vpop.trf.xlu0
        %v347 = vpop.trf.xlu0
        %v348 = vpop.trf.xlu0
        %v349 = vpop.trf.xlu0
        %v350 = vpop.trf.xlu0
        %v351 = vpop.trf.xlu0
        %v352 = vpop.trf.xlu0
        %v353 = vpop.trf.xlu0
        %v354 = vpop.trf.xlu0
        %v355 = vpop.trf.xlu0
        %vm356 = vcmask 64512
        %v358 = vsel %vm356, %v340, 0
        %360 = vmatprep.subr.mxu0 0.0
        %361 = vmatpush1.msra.mxu0 0.0
        %362 = vmatprep.subr.mxu0 0.0
        %363 = vmatpush1.msra.mxu0 0.0
        %364 = vmatprep.subr.mxu0 0.0
        %365 = vmatpush1.msra.mxu0 0.0
        %366 = vmatprep.subr.mxu0 0.0
        %367 = vmatpush1.msra.mxu0 0.0
        %368 = vmatprep.subr.mxu0 0.0
        %369 = vmatpush1.msra.mxu0 0.0
        %370 = vmatprep.subr.mxu0 0.0
        %371 = vmatpush1.msra.mxu0 0.0
        %372 = vmatprep.subr.mxu0 0.0
        %373 = vmatpush1.msra.mxu0 0.0
        %374 = vmatprep.subr.mxu0 0.0
        %375 = vmatpush1.msra.mxu0 0.0
        %376 = vmatprep.subr.mxu0 0.0
        %377 = vmatpush1.msra.mxu0 0.0
        %378 = vmatprep.subr.mxu0 0.0
        %379 = vmatpush1.msra.mxu0 0.0
        %380 = vmatprep.subr.mxu0 0.0
        %381 = vmatpush1.msra.mxu0 0.0
        %382 = vmatprep.subr.mxu0 0.0
        %383 = vmatpush1.msra.mxu0 0.0
        %384 = vmatprep.subr.mxu0 0.0
        %385 = vmatpush1.msra.mxu0 0.0
        %386 = vmatprep.subr.mxu0 0.0
        %387 = vmatpush1.msra.mxu0 0.0
        %388 = vmatprep.subr.mxu0 0.0
        %389 = vmatpush1.msra.mxu0 0.0
        %390 = vmatprep.subr.mxu0 0.0
        %391 = vmatpush1.msra.mxu0 %v198
        %392 = vmatprep.subr.mxu0 0.0
        %393 = vmatpush2.msra.mxu0 0.0
        %394 = vmatprep.subr.mxu0 0.0
        %395 = vmatpush2.msra.mxu0 0.0
        %396 = vmatprep.subr.mxu0 0.0
        %397 = vmatpush2.msra.mxu0 0.0
        %398 = vmatprep.subr.mxu0 0.0
        %399 = vmatpush2.msra.mxu0 0.0
        %400 = vmatprep.subr.mxu0 0.0
        %401 = vmatpush2.msra.mxu0 0.0
        %402 = vmatprep.subr.mxu0 0.0
        %403 = vmatpush2.msra.mxu0 0.0
        %404 = vmatprep.subr.mxu0 0.0
        %405 = vmatpush2.msra.mxu0 0.0
        %406 = vmatprep.subr.mxu0 0.0
        %407 = vmatpush2.msra.mxu0 0.0
        %408 = vmatprep.subr.mxu0 0.0
        %409 = vmatpush2.msra.mxu0 0.0
        %410 = vmatprep.subr.mxu0 0.0
        %411 = vmatpush2.msra.mxu0 0.0
        %412 = vmatprep.subr.mxu0 0.0
        %413 = vmatpush2.msra.mxu0 0.0
        %414 = vmatprep.subr.mxu0 0.0
        %415 = vmatpush2.msra.mxu0 0.0
        %416 = vmatprep.subr.mxu0 0.0
        %417 = vmatpush2.msra.mxu0 0.0
        %418 = vmatprep.subr.mxu0 0.0
        %419 = vmatpush2.msra.mxu0 0.0
        %420 = vmatprep.subr.mxu0 0.0
        %421 = vmatpush2.msra.mxu0 0.0
        %422 = vmatprep.subr.mxu0 0.0
        %423 = vmatpush2.msra.mxu0 0.0
        %424 = vmatprep.mubr.f32.mxu0 0.0
        %425 = vmatmul.mubr.f32.gmra.mxu0 %v358
        %v426 = vpop.f32.mrf.mxu0
        %v427 = vadd.f32 0.0, %v426
        %v428 = vpop.f32.mrf.mxu0
        %429 = vdwg.mxu0
        %vm430 = vcmask 254976
        %431 = vst.msk [vmem:[#allocation2] sm:$0x3] %vm430, %v427
        %v432 = vsel %vm304, %v291, -inf
        %v433 = vrot.slane %v432, 4
        %v434 = vmax.f32 %v432, %v433
        %v435 = vrot.slane %v434, 2
        %v436 = vmax.f32 %v434, %v435
        %v437 = vrot.slane %v436, 1
        %v438 = vmax.f32 %v436, %v437
        %v439 = vsub.f32 %v291, %v438
        %v440 = vmul.f32 %v439, 1.442695
        %v441 = vpow.pop %v440
        %v442 = vsel %vm304, %v441, 0.0
        %v443 = vrot.slane %v442, 4
        %v444 = vadd.f32 %v442, %v443
        %v445 = vrot.slane %v444, 2
        %v446 = vadd.f32 %v444, %v445
        %v447 = vrot.slane %v446, 1
        %v448 = vadd.f32 %v446, %v447
        %v449 = vrcp.pop %v448
        %v450 = vmul.f32 %v441, %v449
        %451 = vxpose.xlu0.b32.start [1/16] %v450, 128
        %452 = vxpose.xlu0.b32.cont [2/16] 0.0, 128
        %453 = vxpose.xlu0.b32.cont [3/16] 0.0, 128
        %454 = vxpose.xlu0.b32.cont [4/16] 0.0, 128
        %455 = vxpose.xlu0.b32.cont [5/16] 0.0, 128
        %456 = vxpose.xlu0.b32.cont [6/16] 0.0, 128
        %457 = vxpose.xlu0.b32.cont [7/16] 0.0, 128
        %458 = vxpose.xlu0.b32.cont [8/16] 0.0, 128
        %459 = vxpose.xlu0.b32.cont [9/16] 0.0, 128
        %460 = vxpose.xlu0.b32.cont [10/16] 0.0, 128
        %461 = vxpose.xlu0.b32.cont [11/16] 0.0, 128
        %462 = vxpose.xlu0.b32.cont [12/16] 0.0, 128
        %463 = vxpose.xlu0.b32.cont [13/16] 0.0, 128
        %464 = vxpose.xlu0.b32.cont [14/16] 0.0, 128
        %465 = vxpose.xlu0.b32.cont [15/16] 0.0, 128
        %466 = vxpose.xlu0.b32.end [16/16] 0.0, 128
        %v467 = vpop.trf.xlu0
        %v468 = vpop.trf.xlu0
        %v469 = vpop.trf.xlu0
        %v470 = vpop.trf.xlu0
        %v471 = vpop.trf.xlu0
        %v472 = vpop.trf.xlu0
        %v473 = vpop.trf.xlu0
        %v474 = vpop.trf.xlu0
        %v475 = vpop.trf.xlu0
        %v476 = vpop.trf.xlu0
        %v477 = vpop.trf.xlu0
        %v478 = vpop.trf.xlu0
        %v479 = vpop.trf.xlu0
        %v480 = vpop.trf.xlu0
        %v481 = vpop.trf.xlu0
        %v482 = vpop.trf.xlu0
        %v484 = vsel %vm356, %v467, 0
        %486 = vmatprep.subr.mxu0 0.0
        %487 = vmatpush1.msra.mxu0 0.0
        %488 = vmatprep.subr.mxu0 0.0
        %489 = vmatpush1.msra.mxu0 0.0
        %490 = vmatprep.subr.mxu0 0.0
        %491 = vmatpush1.msra.mxu0 0.0
        %492 = vmatprep.subr.mxu0 0.0
        %493 = vmatpush1.msra.mxu0 0.0
        %494 = vmatprep.subr.mxu0 0.0
        %495 = vmatpush1.msra.mxu0 0.0
        %496 = vmatprep.subr.mxu0 0.0
        %497 = vmatpush1.msra.mxu0 0.0
        %498 = vmatprep.subr.mxu0 0.0
        %499 = vmatpush1.msra.mxu0 0.0
        %500 = vmatprep.subr.mxu0 0.0
        %501 = vmatpush1.msra.mxu0 0.0
        %502 = vmatprep.subr.mxu0 0.0
        %503 = vmatpush1.msra.mxu0 0.0
        %504 = vmatprep.subr.mxu0 0.0
        %505 = vmatpush1.msra.mxu0 0.0
        %506 = vmatprep.subr.mxu0 0.0
        %507 = vmatpush1.msra.mxu0 0.0
        %508 = vmatprep.subr.mxu0 0.0
        %509 = vmatpush1.msra.mxu0 0.0
        %510 = vmatprep.subr.mxu0 0.0
        %511 = vmatpush1.msra.mxu0 0.0
        %512 = vmatprep.subr.mxu0 0.0
        %513 = vmatpush1.msra.mxu0 0.0
        %514 = vmatprep.subr.mxu0 0.0
        %515 = vmatpush1.msra.mxu0 0.0
        %516 = vmatprep.subr.mxu0 0.0
        %517 = vmatpush1.msra.mxu0 %v199
        %518 = vmatprep.subr.mxu0 0.0
        %519 = vmatpush2.msra.mxu0 0.0
        %520 = vmatprep.subr.mxu0 0.0
        %521 = vmatpush2.msra.mxu0 0.0
        %522 = vmatprep.subr.mxu0 0.0
        %523 = vmatpush2.msra.mxu0 0.0
        %524 = vmatprep.subr.mxu0 0.0
        %525 = vmatpush2.msra.mxu0 0.0
        %526 = vmatprep.subr.mxu0 0.0
        %527 = vmatpush2.msra.mxu0 0.0
        %528 = vmatprep.subr.mxu0 0.0
        %529 = vmatpush2.msra.mxu0 0.0
        %530 = vmatprep.subr.mxu0 0.0
        %531 = vmatpush2.msra.mxu0 0.0
        %532 = vmatprep.subr.mxu0 0.0
        %533 = vmatpush2.msra.mxu0 0.0
        %534 = vmatprep.subr.mxu0 0.0
        %535 = vmatpush2.msra.mxu0 0.0
        %536 = vmatprep.subr.mxu0 0.0
        %537 = vmatpush2.msra.mxu0 0.0
        %538 = vmatprep.subr.mxu0 0.0
        %539 = vmatpush2.msra.mxu0 0.0
        %540 = vmatprep.subr.mxu0 0.0
        %541 = vmatpush2.msra.mxu0 0.0
        %542 = vmatprep.subr.mxu0 0.0
        %543 = vmatpush2.msra.mxu0 0.0
        %544 = vmatprep.subr.mxu0 0.0
        %545 = vmatpush2.msra.mxu0 0.0
        %546 = vmatprep.subr.mxu0 0.0
        %547 = vmatpush2.msra.mxu0 0.0
        %548 = vmatprep.subr.mxu0 0.0
        %549 = vmatpush2.msra.mxu0 0.0
        %550 = vmatprep.mubr.f32.mxu0 0.0
        %551 = vmatmul.mubr.f32.gmra.mxu0 %v484
        %v552 = vpop.f32.mrf.mxu0
        %v553 = vadd.f32 0.0, %v552
        %v554 = vpop.f32.mrf.mxu0
        %555 = vdwg.mxu0
        %556 = vst.msk [vmem:[#allocation2 + $0x2] sm:$0x3] %vm430, %v553
        %v557 = vsel %vm304, %v296, -inf
        %v558 = vrot.slane %v557, 4
        %v559 = vmax.f32 %v557, %v558
        %v560 = vrot.slane %v559, 2
        %v561 = vmax.f32 %v559, %v560
        %v562 = vrot.slane %v561, 1
        %v563 = vmax.f32 %v561, %v562
        %v564 = vsub.f32 %v296, %v563
        %v565 = vmul.f32 %v564, 1.442695
        %v566 = vpow.pop %v565
        %v567 = vsel %vm304, %v566, 0.0
        %v568 = vrot.slane %v567, 4
        %v569 = vadd.f32 %v567, %v568
        %v570 = vrot.slane %v569, 2
        %v571 = vadd.f32 %v569, %v570
        %v572 = vrot.slane %v571, 1
        %v573 = vadd.f32 %v571, %v572
        %v574 = vrcp.pop %v573
        %v575 = vmul.f32 %v566, %v574
        %576 = vxpose.xlu0.b32.start [1/16] %v575, 128
        %577 = vxpose.xlu0.b32.cont [2/16] 0.0, 128
        %578 = vxpose.xlu0.b32.cont [3/16] 0.0, 128
        %579 = vxpose.xlu0.b32.cont [4/16] 0.0, 128
        %580 = vxpose.xlu0.b32.cont [5/16] 0.0, 128
        %581 = vxpose.xlu0.b32.cont [6/16] 0.0, 128
        %582 = vxpose.xlu0.b32.cont [7/16] 0.0, 128
        %583 = vxpose.xlu0.b32.cont [8/16] 0.0, 128
        %584 = vxpose.xlu0.b32.cont [9/16] 0.0, 128
        %585 = vxpose.xlu0.b32.cont [10/16] 0.0, 128
        %586 = vxpose.xlu0.b32.cont [11/16] 0.0, 128
        %587 = vxpose.xlu0.b32.cont [12/16] 0.0, 128
        %588 = vxpose.xlu0.b32.cont [13/16] 0.0, 128
        %589 = vxpose.xlu0.b32.cont [14/16] 0.0, 128
        %590 = vxpose.xlu0.b32.cont [15/16] 0.0, 128
        %591 = vxpose.xlu0.b32.end [16/16] 0.0, 128
        %v592 = vpop.trf.xlu0
        %v593 = vpop.trf.xlu0
        %v594 = vpop.trf.xlu0
        %v595 = vpop.trf.xlu0
        %v596 = vpop.trf.xlu0
        %v597 = vpop.trf.xlu0
        %v598 = vpop.trf.xlu0
        %v599 = vpop.trf.xlu0
        %v600 = vpop.trf.xlu0
        %v601 = vpop.trf.xlu0
        %v602 = vpop.trf.xlu0
        %v603 = vpop.trf.xlu0
        %v604 = vpop.trf.xlu0
        %v605 = vpop.trf.xlu0
        %v606 = vpop.trf.xlu0
        %v607 = vpop.trf.xlu0
        %v609 = vsel %vm356, %v592, 0
        %611 = vmatprep.subr.mxu0 0.0
        %612 = vmatpush1.msra.mxu0 0.0
        %613 = vmatprep.subr.mxu0 0.0
        %614 = vmatpush1.msra.mxu0 0.0
        %615 = vmatprep.subr.mxu0 0.0
        %616 = vmatpush1.msra.mxu0 0.0
        %617 = vmatprep.subr.mxu0 0.0
        %618 = vmatpush1.msra.mxu0 0.0
        %619 = vmatprep.subr.mxu0 0.0
        %620 = vmatpush1.msra.mxu0 0.0
        %621 = vmatprep.subr.mxu0 0.0
        %622 = vmatpush1.msra.mxu0 0.0
        %623 = vmatprep.subr.mxu0 0.0
        %624 = vmatpush1.msra.mxu0 0.0
        %625 = vmatprep.subr.mxu0 0.0
        %626 = vmatpush1.msra.mxu0 0.0
        %627 = vmatprep.subr.mxu0 0.0
        %628 = vmatpush1.msra.mxu0 0.0
        %629 = vmatprep.subr.mxu0 0.0
        %630 = vmatpush1.msra.mxu0 0.0
        %631 = vmatprep.subr.mxu0 0.0
        %632 = vmatpush1.msra.mxu0 0.0
        %633 = vmatprep.subr.mxu0 0.0
        %634 = vmatpush1.msra.mxu0 0.0
        %635 = vmatprep.subr.mxu0 0.0
        %636 = vmatpush1.msra.mxu0 0.0
        %637 = vmatprep.subr.mxu0 0.0
        %638 = vmatpush1.msra.mxu0 0.0
        %639 = vmatprep.subr.mxu0 0.0
        %640 = vmatpush1.msra.mxu0 0.0
        %641 = vmatprep.subr.mxu0 0.0
        %642 = vmatpush1.msra.mxu0 %v200
        %643 = vmatprep.subr.mxu0 0.0
        %644 = vmatpush2.msra.mxu0 0.0
        %645 = vmatprep.subr.mxu0 0.0
        %646 = vmatpush2.msra.mxu0 0.0
        %647 = vmatprep.subr.mxu0 0.0
        %648 = vmatpush2.msra.mxu0 0.0
        %649 = vmatprep.subr.mxu0 0.0
        %650 = vmatpush2.msra.mxu0 0.0
        %651 = vmatprep.subr.mxu0 0.0
        %652 = vmatpush2.msra.mxu0 0.0
        %653 = vmatprep.subr.mxu0 0.0
        %654 = vmatpush2.msra.mxu0 0.0
        %655 = vmatprep.subr.mxu0 0.0
        %656 = vmatpush2.msra.mxu0 0.0
        %657 = vmatprep.subr.mxu0 0.0
        %658 = vmatpush2.msra.mxu0 0.0
        %659 = vmatprep.subr.mxu0 0.0
        %660 = vmatpush2.msra.mxu0 0.0
        %661 = vmatprep.subr.mxu0 0.0
        %662 = vmatpush2.msra.mxu0 0.0
        %663 = vmatprep.subr.mxu0 0.0
        %664 = vmatpush2.msra.mxu0 0.0
        %665 = vmatprep.subr.mxu0 0.0
        %666 = vmatpush2.msra.mxu0 0.0
        %667 = vmatprep.subr.mxu0 0.0
        %668 = vmatpush2.msra.mxu0 0.0
        %669 = vmatprep.subr.mxu0 0.0
        %670 = vmatpush2.msra.mxu0 0.0
        %671 = vmatprep.subr.mxu0 0.0
        %672 = vmatpush2.msra.mxu0 0.0
        %673 = vmatprep.subr.mxu0 0.0
        %674 = vmatpush2.msra.mxu0 0.0
        %675 = vmatprep.mubr.f32.mxu0 0.0
        %676 = vmatmul.mubr.f32.gmra.mxu0 %v609
        %v677 = vpop.f32.mrf.mxu0
        %v678 = vadd.f32 0.0, %v677
        %v679 = vpop.f32.mrf.mxu0
        %680 = vdwg.mxu0
        %681 = vst.msk [vmem:[#allocation2 + $0x4] sm:$0x3] %vm430, %v678
        %v682 = vsel %vm304, %v301, -inf
        %v683 = vrot.slane %v682, 4
        %v684 = vmax.f32 %v682, %v683
        %v685 = vrot.slane %v684, 2
        %v686 = vmax.f32 %v684, %v685
        %v687 = vrot.slane %v686, 1
        %v688 = vmax.f32 %v686, %v687
        %v689 = vsub.f32 %v301, %v688
        %v690 = vmul.f32 %v689, 1.442695
        %v691 = vpow.pop %v690
        %v692 = vsel %vm304, %v691, 0.0
        %v693 = vrot.slane %v692, 4
        %v694 = vadd.f32 %v692, %v693
        %v695 = vrot.slane %v694, 2
        %v696 = vadd.f32 %v694, %v695
        %v697 = vrot.slane %v696, 1
        %v698 = vadd.f32 %v696, %v697
        %v699 = vrcp.pop %v698
        %v700 = vmul.f32 %v691, %v699
        %701 = vxpose.xlu0.b32.start [1/16] %v700, 128
        %702 = vxpose.xlu0.b32.cont [2/16] 0.0, 128
        %703 = vxpose.xlu0.b32.cont [3/16] 0.0, 128
        %704 = vxpose.xlu0.b32.cont [4/16] 0.0, 128
        %705 = vxpose.xlu0.b32.cont [5/16] 0.0, 128
        %706 = vxpose.xlu0.b32.cont [6/16] 0.0, 128
        %707 = vxpose.xlu0.b32.cont [7/16] 0.0, 128
        %708 = vxpose.xlu0.b32.cont [8/16] 0.0, 128
        %709 = vxpose.xlu0.b32.cont [9/16] 0.0, 128
        %710 = vxpose.xlu0.b32.cont [10/16] 0.0, 128
        %711 = vxpose.xlu0.b32.cont [11/16] 0.0, 128
        %712 = vxpose.xlu0.b32.cont [12/16] 0.0, 128
        %713 = vxpose.xlu0.b32.cont [13/16] 0.0, 128
        %714 = vxpose.xlu0.b32.cont [14/16] 0.0, 128
        %715 = vxpose.xlu0.b32.cont [15/16] 0.0, 128
        %716 = vxpose.xlu0.b32.end [16/16] 0.0, 128
        %v717 = vpop.trf.xlu0
        %v718 = vpop.trf.xlu0
        %v719 = vpop.trf.xlu0
        %v720 = vpop.trf.xlu0
        %v721 = vpop.trf.xlu0
        %v722 = vpop.trf.xlu0
        %v723 = vpop.trf.xlu0
        %v724 = vpop.trf.xlu0
        %v725 = vpop.trf.xlu0
        %v726 = vpop.trf.xlu0
        %v727 = vpop.trf.xlu0
        %v728 = vpop.trf.xlu0
        %v729 = vpop.trf.xlu0
        %v730 = vpop.trf.xlu0
        %v731 = vpop.trf.xlu0
        %v732 = vpop.trf.xlu0
        %v734 = vsel %vm356, %v717, 0
        %736 = vmatprep.subr.mxu0 0.0
        %737 = vmatpush1.msra.mxu0 0.0
        %738 = vmatprep.subr.mxu0 0.0
        %739 = vmatpush1.msra.mxu0 0.0
        %740 = vmatprep.subr.mxu0 0.0
        %741 = vmatpush1.msra.mxu0 0.0
        %742 = vmatprep.subr.mxu0 0.0
        %743 = vmatpush1.msra.mxu0 0.0
        %744 = vmatprep.subr.mxu0 0.0
        %745 = vmatpush1.msra.mxu0 0.0
        %746 = vmatprep.subr.mxu0 0.0
        %747 = vmatpush1.msra.mxu0 0.0
        %748 = vmatprep.subr.mxu0 0.0
        %749 = vmatpush1.msra.mxu0 0.0
        %750 = vmatprep.subr.mxu0 0.0
        %751 = vmatpush1.msra.mxu0 0.0
        %752 = vmatprep.subr.mxu0 0.0
        %753 = vmatpush1.msra.mxu0 0.0
        %754 = vmatprep.subr.mxu0 0.0
        %755 = vmatpush1.msra.mxu0 0.0
        %756 = vmatprep.subr.mxu0 0.0
        %757 = vmatpush1.msra.mxu0 0.0
        %758 = vmatprep.subr.mxu0 0.0
        %759 = vmatpush1.msra.mxu0 0.0
        %760 = vmatprep.subr.mxu0 0.0
        %761 = vmatpush1.msra.mxu0 0.0
        %762 = vmatprep.subr.mxu0 0.0
        %763 = vmatpush1.msra.mxu0 0.0
        %764 = vmatprep.subr.mxu0 0.0
        %765 = vmatpush1.msra.mxu0 0.0
        %766 = vmatprep.subr.mxu0 0.0
        %767 = vmatpush1.msra.mxu0 %v201
        %768 = vmatprep.subr.mxu0 0.0
        %769 = vmatpush2.msra.mxu0 0.0
        %770 = vmatprep.subr.mxu0 0.0
        %771 = vmatpush2.msra.mxu0 0.0
        %772 = vmatprep.subr.mxu0 0.0
        %773 = vmatpush2.msra.mxu0 0.0
        %774 = vmatprep.subr.mxu0 0.0
        %775 = vmatpush2.msra.mxu0 0.0
        %776 = vmatprep.subr.mxu0 0.0
        %777 = vmatpush2.msra.mxu0 0.0
        %778 = vmatprep.subr.mxu0 0.0
        %779 = vmatpush2.msra.mxu0 0.0
        %780 = vmatprep.subr.mxu0 0.0
        %781 = vmatpush2.msra.mxu0 0.0
        %782 = vmatprep.subr.mxu0 0.0
        %783 = vmatpush2.msra.mxu0 0.0
        %784 = vmatprep.subr.mxu0 0.0
        %785 = vmatpush2.msra.mxu0 0.0
        %786 = vmatprep.subr.mxu0 0.0
        %787 = vmatpush2.msra.mxu0 0.0
        %788 = vmatprep.subr.mxu0 0.0
        %789 = vmatpush2.msra.mxu0 0.0
        %790 = vmatprep.subr.mxu0 0.0
        %791 = vmatpush2.msra.mxu0 0.0
        %792 = vmatprep.subr.mxu0 0.0
        %793 = vmatpush2.msra.mxu0 0.0
        %794 = vmatprep.subr.mxu0 0.0
        %795 = vmatpush2.msra.mxu0 0.0
        %796 = vmatprep.subr.mxu0 0.0
        %797 = vmatpush2.msra.mxu0 0.0
        %798 = vmatprep.subr.mxu0 0.0
        %799 = vmatpush2.msra.mxu0 0.0
        %800 = vmatprep.mubr.f32.mxu0 0.0
        %801 = vmatmul.mubr.f32.gmra.mxu0 %v734
        %v802 = vpop.f32.mrf.mxu0
        %v803 = vadd.f32 0.0, %v802
        %v804 = vpop.f32.mrf.mxu0
        %805 = vdwg.mxu0
        %806 = vst.msk [vmem:[#allocation2 + $0x6] sm:$0x3] %vm430, %v803
        %v807 = vld [vmem:[#allocation2] sm:$0xff]
        %v808 = vld [vmem:[%s2] sm:$0xff]
        %v809 = vld [vmem:[%s2 + $0x8] sm:$0xff]
        %v810 = vld [vmem:[%s2 + $0x10] sm:$0xff]
        %v811 = vld [vmem:[%s2 + $0x18] sm:$0xff]
        %v812 = vld [vmem:[%s3] sm:$0x1]
        %v814 = vlaneseq
        %v815 = vshrl.u32 %v814, 7
        %v816 = vsub.s32 0, %v815
        %v817 = vrot.slane %v812, %v816
        %v820 = vsel %vm203, %v807, 0
        %822 = vmatprep.subr.mxu0 0.0
        %823 = vmatpush1.msra.mxu0 0.0
        %824 = vmatprep.subr.mxu0 0.0
        %825 = vmatpush1.msra.mxu0 0.0
        %826 = vmatprep.subr.mxu0 0.0
        %827 = vmatpush1.msra.mxu0 0.0
        %828 = vmatprep.subr.mxu0 0.0
        %829 = vmatpush1.msra.mxu0 0.0
        %830 = vmatprep.subr.mxu0 0.0
        %831 = vmatpush1.msra.mxu0 0.0
        %832 = vmatprep.subr.mxu0 0.0
        %833 = vmatpush1.msra.mxu0 0.0
        %834 = vmatprep.subr.mxu0 0.0
        %835 = vmatpush1.msra.mxu0 0.0
        %836 = vmatprep.subr.mxu0 0.0
        %837 = vmatpush1.msra.mxu0 0.0
        %838 = vmatprep.subr.mxu0 0.0
        %839 = vmatpush1.msra.mxu0 0.0
        %840 = vmatprep.subr.mxu0 0.0
        %841 = vmatpush1.msra.mxu0 0.0
        %842 = vmatprep.subr.mxu0 0.0
        %843 = vmatpush1.msra.mxu0 0.0
        %844 = vmatprep.subr.mxu0 0.0
        %845 = vmatpush1.msra.mxu0 0.0
        %846 = vmatprep.subr.mxu0 0.0
        %847 = vmatpush1.msra.mxu0 %v811
        %848 = vmatprep.subr.mxu0 0.0
        %849 = vmatpush1.msra.mxu0 %v810
        %850 = vmatprep.subr.mxu0 0.0
        %851 = vmatpush1.msra.mxu0 %v809
        %852 = vmatprep.subr.mxu0 0.0
        %853 = vmatpush1.msra.mxu0 %v808
        %854 = vmatprep.subr.mxu0 0.0
        %855 = vmatpush2.msra.mxu0 0.0
        %856 = vmatprep.subr.mxu0 0.0
        %857 = vmatpush2.msra.mxu0 0.0
        %858 = vmatprep.subr.mxu0 0.0
        %859 = vmatpush2.msra.mxu0 0.0
        %860 = vmatprep.subr.mxu0 0.0
        %861 = vmatpush2.msra.mxu0 0.0
        %862 = vmatprep.subr.mxu0 0.0
        %863 = vmatpush2.msra.mxu0 0.0
        %864 = vmatprep.subr.mxu0 0.0
        %865 = vmatpush2.msra.mxu0 0.0
        %866 = vmatprep.subr.mxu0 0.0
        %867 = vmatpush2.msra.mxu0 0.0
        %868 = vmatprep.subr.mxu0 0.0
        %869 = vmatpush2.msra.mxu0 0.0
        %870 = vmatprep.subr.mxu0 0.0
        %871 = vmatpush2.msra.mxu0 0.0
        %872 = vmatprep.subr.mxu0 0.0
        %873 = vmatpush2.msra.mxu0 0.0
        %874 = vmatprep.subr.mxu0 0.0
        %875 = vmatpush2.msra.mxu0 0.0
        %876 = vmatprep.subr.mxu0 0.0
        %877 = vmatpush2.msra.mxu0 0.0
        %878 = vmatprep.subr.mxu0 0.0
        %879 = vmatpush2.msra.mxu0 0.0
        %880 = vmatprep.subr.mxu0 0.0
        %881 = vmatpush2.msra.mxu0 0.0
        %882 = vmatprep.subr.mxu0 0.0
        %883 = vmatpush2.msra.mxu0 0.0
        %884 = vmatprep.subr.mxu0 0.0
        %885 = vmatpush2.msra.mxu0 0.0
        %886 = vmatprep.mubr.f32.mxu0 0.0
        %887 = vmatmul.mubr.f32.gmra.mxu0 %v820
        %v888 = vpop.f32.mrf.mxu0
        %v889 = vadd.f32 %v817, %v888
        %v890 = vpop.f32.mrf.mxu0
        %891 = vdwg.mxu0
        %892 = vst.msk [vmem:[%s191] sm:$0xff] %vm203, %v889
        %s893 = sand.u32 %s115, 1
        %s894 = scalar_lea.sflag [#allocation4], %s893
        %s895 = sand.u32 %s115, 1
        %s896 = smul.addr %s895, 8
        %s897 = scalar_lea.vmem [#allocation3], %s896
        // Predicated region
        $region37: #{tpu_custom_call.1} parent=35 // pred_check
          %p898 = pneg %p125
        $region38: #{tpu_custom_call.1} parent=35 // pred_check_branch
          %900 = sbr.rel (%p898) target = $region40
        $region39: #{tpu_custom_call.1} parent=35 // pred_region
          %s902 = ssub.s32 128, 128
          %903 = vsyncadd %s894, %s902
          %s904 = smul.addr %s18, 128
          %s905 = scalar_lea.hbm %s4, %s904
          %s907 = sshll.u32 %s897, 4
          %s908 = int_to_ptr.vmem [resolvable:$true] %s907
          %910 = dma.vmem_to_hbm [thread:$0]  %s908, 128, %s905, %s894
        $region40: #{tpu_custom_call.1} parent=35 // pred_fallthru
          _
      $region36: #{tpu_custom_call.1} parent=5 // pred_fallthru
        _
      %p911 = scmp.le.s32.totalorder 2, %s13
      // Predicated region
      $region41: #{tpu_custom_call.1} parent=5 // pred_check
        %p912 = pneg %p911
      $region42: #{tpu_custom_call.1} parent=5 // pred_check_branch
        %914 = sbr.rel (%p912) target = $region44
      $region43: #{tpu_custom_call.1} parent=5 // pred_region
        %s915 = ssub.s32 %s13, 2
        // Predicated region
        $region45: #{tpu_custom_call.1} parent=43 // pred_check
          %p916 = pneg %p131
        $region46: #{tpu_custom_call.1} parent=43 // pred_check_branch
          %918 = sbr.rel (%p916) target = $region48
        $region47: #{tpu_custom_call.1} parent=43 // pred_region
          %s919 = sand.u32 %s116, 1
          %s920 = scalar_lea.sflag [#allocation4], %s919
          %s921 = sand.u32 %s116, 1
          %s922 = smul.addr %s921, 8
          %s923 = scalar_lea.vmem [#allocation3], %s922
          %924 = dma.done %s920, 128
        $region48: #{tpu_custom_call.1} parent=43 // pred_fallthru
          _
      $region44: #{tpu_custom_call.1} parent=5 // pred_fallthru
        _
    $region6: #{tpu_custom_call.1} parent=1 // loop_footer
      %s17 = sadd.s32 1, %s13
    $region7: #{tpu_custom_call.1} parent=1 // loop_footer_branch
      %12 = sbr.rel target = $region3
    $region8: #{tpu_custom_call.1} parent=1 // loop_exit
      _
    %925 = vsyncpa [#allocation4], 1
    %s926 = scalar_lea.sflag [#allocation4], 1
    %927 = vsyncpa %s926, 1

</llo_original>
